<compile_context>
chip_gen: v5e
topology: v5e:2x2
jax: 0.10.0
libtpu: 0.0.40
codegen_flags: <defaults>
</compile_context>

<pallas_src>
import functools

import jax
import jax.numpy as jnp
from jax import lax
from jax.experimental import pallas as pl
from jax.experimental.pallas import tpu as pltpu


def _round_up(x, m):
    return (x + m - 1) // m * m


def _vmem_budget_bytes():
    """Generation-aware VMEM budget: ~80% of physical capacity.

    v5e/v6e: 128 MiB physical -> ~102 MiB budget; v7x: 64 MiB -> ~51 MiB.
    Falls back to a conservative 64 MiB physical assumption if the trace-time
    hardware query is unavailable.
    """
    cap = 64 << 20
    try:
        info = pltpu.get_tpu_info()
        cap = int(getattr(info, "vmem_capacity_bytes", cap))
    except Exception:
        pass
    return max(int(cap * 0.8), 32 << 20)


# ---------------------------------------------------------------------------
# Kernels
# ---------------------------------------------------------------------------

def _matmul_bias_kernel(a_ref, w_ref, b_ref, o_ref, acc_ref):
    # a_ref: (tm, tk) bf16 patch rows; w_ref: (tk, E_pad) bf16;
    # b_ref: (1, E_pad) f32; acc_ref: (tm, E_pad) f32 scratch.
    k = pl.program_id(1)

    @pl.when(k == 0)
    def _():
        acc_ref[...] = jnp.zeros_like(acc_ref)

    acc_ref[...] += jnp.dot(a_ref[...], w_ref[...],
                            preferred_element_type=jnp.float32)

    @pl.when(k == pl.num_programs(1) - 1)
    def _():
        o_ref[...] = (acc_ref[...] + b_ref[...]).astype(o_ref.dtype)


def _proj_p1_kernel(x_ref, w_ref, b_ref, o_ref):
    # x_ref: (1, C, tn) f32 slab of the raw NCHW activation (H*W flattened).
    # Cast to bf16 first, then contract on the channel axis directly
    # (lhs contracting dim 0 == transposed-LHS MXU matmul); no materialized
    # f32 transpose in VMEM, no HBM round trip for the rearrangement.
    a = x_ref[0].astype(jnp.bfloat16)                       # (C, tn) bf16
    acc = lax.dot_general(
        a, w_ref[...],
        dimension_numbers=(((0,), (0,)), ((), ())),
        preferred_element_type=jnp.float32)                 # (tn, E_pad) f32
    o_ref[0] = (acc + b_ref[...]).astype(o_ref.dtype)


# ---------------------------------------------------------------------------
# patch_size == 1 path: fully fused (no host-side rearrangement at all)
# ---------------------------------------------------------------------------

def _patch_embed_p1(x, weight, bias):
    B, C, H, W = x.shape
    E = weight.shape[0]
    N = H * W

    budget = _vmem_budget_bytes()
    E_pad = _round_up(E, 128)

    x3 = x.reshape(B, C, N)                                  # free reshape
    wmat = weight.reshape(E, C).T.astype(jnp.bfloat16)       # (C, E)
    bvec = bias.reshape(1, E).astype(jnp.float32)
    if E_pad != E:
        # Lane-dense output: pad the embed dim to a multiple of 128 so the
        # kernel stores are full-width vst (not masked partial stores).
        wmat = jnp.pad(wmat, ((0, 0), (0, E_pad - E)))
        bvec = jnp.pad(bvec, ((0, 0), (0, E_pad - E)))

    def per_step_bytes(tn):
        # double-buffered operands + in-kernel bf16 slab + f32 acc + headroom
        return (2 * (C * tn * 4 + C * E_pad * 2 + E_pad * 4 + tn * E_pad * 4)
                + C * tn * 2 + tn * E_pad * 4 + (4 << 20))

    # Patch-axis tile: biggest lane-aligned tile that fits the budget; keep
    # >= 2 total grid steps when possible (v7x megacore).
    pad_n = 0
    if N % 128 == 0:
        tn = 128
        for cand in (1024, 896, 768, 640, 512, 384, 256, 128):
            if cand <= N and N % cand == 0 and per_step_bytes(cand) <= budget:
                if B * (N // cand) >= 2 or cand == 128:
                    tn = cand
                    break
    elif per_step_bytes(N) <= budget:
        tn = N                                  # full dim (exempt from 128 rule)
    else:
        # Large, non-lane-aligned N whose full-N slab would blow the budget
        # (e.g. on v7x): pad the patch axis up to a lane multiple instead.
        N_al = _round_up(N, 128)
        pad_n = N_al - N
        x3 = jnp.pad(x3, ((0, 0), (0, 0), (0, pad_n)))
        tn = 128
        for cand in (1024, 512, 256, 128):
            if cand <= N_al and N_al % cand == 0 and per_step_bytes(cand) <= budget:
                tn = cand
                break
        N = N_al

    grid = (B, N // tn)

    out = pl.pallas_call(
        _proj_p1_kernel,
        out_shape=jax.ShapeDtypeStruct((B, N, E_pad), x.dtype),
        grid_spec=pltpu.PrefetchScalarGridSpec(
            num_scalar_prefetch=0,
            grid=grid,
            in_specs=[
                pl.BlockSpec((1, C, tn), lambda b, j: (b, 0, j)),   # raw NCHW slab
                pl.BlockSpec((C, E_pad), lambda b, j: (0, 0)),      # resident proj
                pl.BlockSpec((1, E_pad), lambda b, j: (0, 0)),      # bias row
            ],
            out_specs=pl.BlockSpec((1, tn, E_pad), lambda b, j: (b, j, 0)),
        ),
        compiler_params=pltpu.CompilerParams(
            dimension_semantics=("parallel", "parallel"),
            vmem_limit_bytes=budget),
    )(x3, wmat, bvec)

    if pad_n:
        out = out[:, :H * W, :]
    if E_pad != E:
        out = out[..., :E]
    return out                                               # (B, num_patches, E)


# ---------------------------------------------------------------------------
# patch_size > 1 path: host-side im2col (bf16) + tiled MXU matmul (+ optional
# K reduction axis with an f32 accumulator when full-K tiles would blow VMEM)
# ---------------------------------------------------------------------------

def _patch_embed_general(x, weight, bias, p):
    B, C, H, W = x.shape
    E = weight.shape[0]
    GH, GW = H // p, W // p
    K = C * p * p
    M = B * GH * GW

    budget = _vmem_budget_bytes()
    E_pad = _round_up(E, 128)

    # im2col: row = b*GH*GW + gh*GW + gw (matches flatten(2).transpose(1,2)),
    # col = c*p*p + kh*p + kw (matches Conv2d weight layout).  The bf16 cast
    # is fused into the same XLA transpose, halving the intermediate bytes.
    # TODO(synk): fuse the im2col into the kernel; the stride-p patch gather
    # needs either relayout-heavy in-VMEM transposes or manual strided DMA, so
    # it stays in XLA for lowering robustness.
    xp = x.reshape(B, C, GH, p, GW, p).transpose(0, 2, 4, 1, 3, 5)
    a = xp.reshape(M, K).astype(jnp.bfloat16)
    wmat = weight.reshape(E, K).T.astype(jnp.bfloat16)        # (K, E)
    bvec = bias.reshape(1, E).astype(jnp.float32)
    if E_pad != E:
        wmat = jnp.pad(wmat, ((0, 0), (0, E_pad - E)))
        bvec = jnp.pad(bvec, ((0, 0), (0, E_pad - E)))

    def per_step_bytes(tm, tk):
        return (2 * (tm * tk * 2 + tk * E_pad * 2 + E_pad * 4 + tm * E_pad * 4)
                + tm * E_pad * 4 + (4 << 20))

    # Tile search: prefer the whole K resident (single reduction step); fall
    # back to a K grid axis when full-K tiles exceed the per-generation
    # budget (e.g. hybrid stems with huge C*p*p on v7x's 64 MiB).
    tm, tk = 128, K
    found = False
    for tk_cand in (K, 2048, 1024, 512, 256):
        if tk_cand != K and tk_cand >= K:
            continue
        for tm_cand in (1024, 512, 256, 128):
            if per_step_bytes(tm_cand, tk_cand) <= budget:
                tm, tk = tm_cand, tk_cand
                found = True
                break
        if found:
            break

    # Keep >= 2 steps on the parallel M axis when M allows (v7x megacore).
    while tm > 128 and _round_up(M, tm) // tm < 2:
        tm //= 2

    M_pad = _round_up(M, tm)
    if M_pad != M:
        a = jnp.pad(a, ((0, M_pad - M), (0, 0)))

    if tk != K:
        K_pad = _round_up(K, tk)
        if K_pad != K:
            a = jnp.pad(a, ((0, 0), (0, K_pad - K)))
            wmat = jnp.pad(wmat, ((0, K_pad - K), (0, 0)))
        K = K_pad
    ksteps = K // tk

    out = pl.pallas_call(
        _matmul_bias_kernel,
        out_shape=jax.ShapeDtypeStruct((M_pad, E_pad), x.dtype),
        grid_spec=pltpu.PrefetchScalarGridSpec(
            num_scalar_prefetch=0,
            grid=(M_pad // tm, ksteps),
            in_specs=[
                pl.BlockSpec((tm, tk), lambda i, k: (i, k)),      # patch rows
                pl.BlockSpec((tk, E_pad), lambda i, k: (k, 0)),   # projection
                pl.BlockSpec((1, E_pad), lambda i, k: (0, 0)),    # bias row
            ],
            out_specs=pl.BlockSpec((tm, E_pad), lambda i, k: (i, 0)),
            scratch_shapes=[pltpu.VMEM((tm, E_pad), jnp.float32)],
        ),
        compiler_params=pltpu.CompilerParams(
            dimension_semantics=("parallel", "arbitrary"),
            vmem_limit_bytes=budget),
    )(a, wmat, bvec)

    out = out[:M]
    if E_pad != E:
        out = out[:, :E]
    return out.reshape(B, GH * GW, E)


# ---------------------------------------------------------------------------
# Public entry point (matches PatchEmbed.forward)
# ---------------------------------------------------------------------------

@functools.partial(jax.jit, static_argnames=("patch_size",))
def patch_embed(x, weight, bias, patch_size):
    """x: (B, C, H, W); weight: (E, C, p, p); bias: (E,) -> (B, GH*GW, E)."""
    _, _, H, W = x.shape
    p = patch_size
    assert H % p == 0 and W % p == 0
    if p == 1:
        return _patch_embed_p1(x, weight, bias)
    return _patch_embed_general(x, weight, bias, p)


if __name__ == "__main__":
    key = jax.random.PRNGKey(0)

    # --- Case 1: patch_size > 1 (im2col + tiled MXU matmul path) ---
    B, C, H, W, P, E = 8, 8, 16, 16, 2, 32
    k1, k2, k3, key = jax.random.split(key, 4)
    x = jax.random.normal(k1, (B, C, H, W), dtype=jnp.float32)
    weight = jax.random.normal(k2, (E, C, P, P), dtype=jnp.float32) * 0.02
    bias = jax.random.normal(k3, (E,), dtype=jnp.float32) * 0.02

    out = jax.block_until_ready(patch_embed(x, weight, bias, patch_size=P))
    GH, GW = H // P, W // P
    xp = x.reshape(B, C, GH, P, GW, P).transpose(0, 2, 4, 1, 3, 5)
    ref = (jnp.einsum("bghckl,eckl->bghe", xp, weight) + bias).reshape(B, GH * GW, E)
    assert out.shape == (B, GH * GW, E)
    assert jnp.allclose(out, ref, atol=2e-2, rtol=2e-2), float(jnp.max(jnp.abs(out - ref)))

    # --- Case 2: patch_size == 1 (module default; fully fused path) ---
    B, C, H, W, P, E = 2, 8, 16, 16, 1, 32
    k1, k2, k3, key = jax.random.split(key, 4)
    x = jax.random.normal(k1, (B, C, H, W), dtype=jnp.float32)
    weight = jax.random.normal(k2, (E, C, P, P), dtype=jnp.float32) * 0.02
    bias = jax.random.normal(k3, (E,), dtype=jnp.float32) * 0.02

    out = jax.block_until_ready(patch_embed(x, weight, bias, patch_size=P))
    ref = (jnp.einsum("bcn,ec->bne", x.reshape(B, C, H * W), weight.reshape(E, C))
           + bias)
    assert out.shape == (B, H * W, E)
    assert jnp.allclose(out, ref, atol=2e-2, rtol=2e-2), float(jnp.max(jnp.abs(out - ref)))

    print("KERNEL_OK")
</pallas_src>

<mosaic_0001>
module attributes {stable_mosaic.version = 11 : i64} {
  func.func @_matmul_bias_kernel(%arg0: i32, %arg1: i32, %arg2: memref<256x32xbf16, #tpu.memory_space<vmem>>, %arg3: memref<32x128xbf16, #tpu.memory_space<vmem>>, %arg4: memref<1x128xf32, #tpu.memory_space<vmem>>, %arg5: memref<256x128xf32, #tpu.memory_space<vmem>>, %arg6: memref<256x128xf32, #tpu.memory_space<vmem>>) attributes {dimension_semantics = [#tpu.dimension_semantics<parallel>, #tpu.dimension_semantics<arbitrary>], iteration_bounds = array<i64: 2, 1>, scalar_prefetch = 0 : i64, scratch_operands = 1 : i64, tpu.core_type = #tpu.core_type<tc>, window_params = [{transform_indices = @transform_0, window_bounds = array<i64: 256, 32>}, {transform_indices = @transform_1, window_bounds = array<i64: 32, 128>}, {pipeline_mode = #tpu.pipeline_mode<synchronous>, transform_indices = @transform_2, window_bounds = array<i64: 1, 128>}, {transform_indices = @transform_3, window_bounds = array<i64: 256, 128>}]} {
    %c0_i32 = arith.constant 0 : i32
    %0 = arith.cmpi eq, %arg1, %c0_i32 : i32
    %1 = arith.extui %0 : i1 to i32
    %c0_i32_0 = arith.constant 0 : i32
    %2 = arith.cmpi ne, %1, %c0_i32_0 : i32
    scf.if %2 {
      %cst_10 = arith.constant 0.000000e+00 : f32
      %12 = vector.broadcast %cst_10 : f32 to vector<256x128xf32>
      %c0_11 = arith.constant 0 : index
      %c0_12 = arith.constant 0 : index
      %13 = vector.load %arg6[%c0_11, %c0_12] : memref<256x128xf32, #tpu.memory_space<vmem>>, vector<256x128xf32>
      tpu.vector_store %arg6[%c0_11, %c0_12], %12 {strides = array<i32>} : memref<256x128xf32, #tpu.memory_space<vmem>>, vector<256x128xf32>,
    } else {
    }
    %c0 = arith.constant 0 : index
    %c0_1 = arith.constant 0 : index
    %3 = vector.load %arg6[%c0, %c0_1] : memref<256x128xf32, #tpu.memory_space<vmem>>, vector<256x128xf32>
    %c0_2 = arith.constant 0 : index
    %c0_3 = arith.constant 0 : index
    %4 = vector.load %arg2[%c0_2, %c0_3] : memref<256x32xbf16, #tpu.memory_space<vmem>>, vector<256x32xbf16>
    %c0_4 = arith.constant 0 : index
    %c0_5 = arith.constant 0 : index
    %5 = vector.load %arg3[%c0_4, %c0_5] : memref<32x128xbf16, #tpu.memory_space<vmem>>, vector<32x128xbf16>
    %cst = arith.constant dense<0.000000e+00> : vector<256x128xf32>
    %6 = tpu.matmul %4, %5, %cst {dimension_numbers = #tpu.dot_dimension_numbers<[1], [0], [0], [1], [0, 0, 1, 1], [], []>} : vector<256x32xbf16>, vector<32x128xbf16>, vector<256x128xf32> -> vector<256x128xf32>
    %7 = arith.addf %3, %6 : vector<256x128xf32>
    %c0_6 = arith.constant 0 : index
    %c0_7 = arith.constant 0 : index
    %8 = vector.load %arg6[%c0_6, %c0_7] : memref<256x128xf32, #tpu.memory_space<vmem>>, vector<256x128xf32>
    tpu.vector_store %arg6[%c0_6, %c0_7], %7 {strides = array<i32>} : memref<256x128xf32, #tpu.memory_space<vmem>>, vector<256x128xf32>,
    %c0_i32_8 = arith.constant 0 : i32
    %9 = arith.cmpi eq, %arg1, %c0_i32_8 : i32
    %10 = arith.extui %9 : i1 to i32
    %c0_i32_9 = arith.constant 0 : i32
    %11 = arith.cmpi ne, %10, %c0_i32_9 : i32
    scf.if %11 {
      %c0_10 = arith.constant 0 : index
      %c0_11 = arith.constant 0 : index
      %12 = vector.load %arg6[%c0_10, %c0_11] : memref<256x128xf32, #tpu.memory_space<vmem>>, vector<256x128xf32>
      %c0_12 = arith.constant 0 : index
      %c0_13 = arith.constant 0 : index
      %13 = vector.load %arg4[%c0_12, %c0_13] : memref<1x128xf32, #tpu.memory_space<vmem>>, vector<1x128xf32>
      %14 = vector.broadcast %13 : vector<1x128xf32> to vector<256x128xf32>
      %15 = arith.addf %12, %14 : vector<256x128xf32>
      %c0_14 = arith.constant 0 : index
      %c0_15 = arith.constant 0 : index
      %16 = vector.load %arg5[%c0_14, %c0_15] : memref<256x128xf32, #tpu.memory_space<vmem>>, vector<256x128xf32>
      tpu.vector_store %arg5[%c0_14, %c0_15], %15 {strides = array<i32>} : memref<256x128xf32, #tpu.memory_space<vmem>>, vector<256x128xf32>,
    } else {
    }
    return
  }
  func.func @transform_0(%arg0: i32, %arg1: i32) -> (i32, i32) {
    %c0_i32 = arith.constant 0 : i32
    return %arg0, %arg1 : i32, i32
  }
  func.func @transform_1(%arg0: i32, %arg1: i32) -> (i32, i32) {
    %c0_i32 = arith.constant 0 : i32
    %c0_i32_0 = arith.constant 0 : i32
    return %arg1, %c0_i32 : i32, i32
  }
  func.func @transform_2(%arg0: i32, %arg1: i32) -> (i32, i32) {
    %c0_i32 = arith.constant 0 : i32
    %c0_i32_0 = arith.constant 0 : i32
    %c0_i32_1 = arith.constant 0 : i32
    return %c0_i32, %c0_i32_0 : i32, i32
  }
  func.func @transform_3(%arg0: i32, %arg1: i32) -> (i32, i32) {
    %c0_i32 = arith.constant 0 : i32
    %c0_i32_0 = arith.constant 0 : i32
    return %arg0, %c0_i32 : i32, i32
  }
}

</mosaic_0001>

<llo_original>
// kernel: patch_embed.1
$region0: #{patch_embed.1}
  #allocation0 [shape = 'u32[]', space=smem, size = 0x4, offset = 0x4, fixed_abs, tag = 'smem constant byte address 0x4 - core index']
  #allocation1 [shape = 'u32[72,128]{1,0:T(1,128)}', space=vmem, size = 0x9000, scoped, tag = 'internal scratch']
  #allocation2 [shape = 'f32[256,128]{1,0:T(8,128)}', space=vmem, size = 0x20000, scoped, tag = 'scratch operand']
  %s0 = inlined_call_operand.vmem [shape: bf16[512,32], index: 0, kind: input, shape index: {}]
  %s1 = inlined_call_operand.vmem [shape: bf16[32,128], index: 1, kind: input, shape index: {}]
  %s2 = inlined_call_operand.vmem [shape: f32[1,128], index: 2, kind: input, shape index: {}]
  %s3 = inlined_call_operand.vmem [shape: f32[512,128], index: 3, kind: output, shape index: {}]
  %s4 = sld [smem:[#allocation0]]
  $region53: #{patch_embed.1} parent=0
    _
  %s6 = ssub.s32 1, %s4
  %s7 = scalar_select 0, %s6, %s4
  loop: start=0, step=1, limit=4
  $region2: #{patch_embed.1} parent=0 // loop_pre_header
    _
  $region3: #{patch_embed.1} parent=0 // loop_header
    %s9 = sphi 0, %s13
    %p10 = scmp.ge.s32.totalorder %s9, 4
    %s16 = sphi 0, %s28
    %s17 = sphi 0, %s24
    %s18 = sphi 0, %s16
    %s19 = sphi 0, %s17
    %s20 = sphi 0, %s18
    %s21 = sphi 0, %s19
    %s33 = sphi 0, %s35
    %s36 = sphi 0, %s33
    %s37 = sphi 0, %s36
    %s53 = sphi 0, %s37
    %s59 = sphi 0, %s61
    %s62 = sphi 0, %s59
    %s63 = sphi 0, %s62
    %s79 = sphi 0, %s63
    %s83 = sphi 0, %s83
    %s85 = sphi 0, %s83
    %s86 = sphi 0, %s85
    %s100 = sphi 0, %s86
    %s106 = sphi 0, %s108
    %s109 = sphi 0, %s106
    %s110 = sphi 0, %s109
    %s126 = sphi 0, %s110
  $region4: #{patch_embed.1} parent=0 // loop_header_branch
    %12 = sbr.rel (%p10) target = $region8
  $region5: #{patch_embed.1} parent=0 // loop_body
    %s14 = ssub.s32 %s9, 1
    %s15 = ssub.s32 %s9, 2
    %s22 = sadd.s32 1, %s17
    %p23 = scmp.ge.s32.totalorder %s22, 1
    %s24 = scalar_select %p23, 0, %s22
    %s25 = sadd.s32 1, %s16
    %s26 = scalar_select %p23, %s25, %s16
    %p27 = scmp.ge.s32.totalorder %s26, 2
    %s28 = scalar_select %p27, 0, %s26
    %s29 = ssub.s32 %s16, %s28
    %s30 = ssub.s32 %s17, %s24
    %s31 = sor.u32 %s29, %s30
    %p32 = scmp.eq.s32.totalorder %s31, 0
    %s34 = sadd.s32 %s33, 1
    %s35 = scalar_select %p32, %s33, %s34
    %p38 = pneg %p32
    %p39 = scmp.eq.s32.totalorder %s9, 1
    %p40 = por %p38, %p39
    %p41 = scmp.ne.s32.totalorder %s33, %s36
    %p42 = scmp.eq.s32.totalorder %s9, 0
    %p43 = por %p41, %p42
    %p44 = scmp.ne.s32.totalorder %s33, %s36
    %p45 = scmp.eq.s32.totalorder %s14, 1
    %p46 = por %p44, %p45
    %p47 = scmp.ne.s32.totalorder %s36, %s37
    %p48 = scmp.eq.s32.totalorder %s14, 0
    %p49 = por %p47, %p48
    %p50 = scmp.ne.s32.totalorder %s36, %s37
    %p51 = scmp.eq.s32.totalorder %s15, 1
    %p52 = por %p50, %p51
    %p54 = scmp.ne.s32.totalorder %s37, %s53
    %p55 = scmp.eq.s32.totalorder %s15, 0
    %p56 = por %p54, %p55
    %s57 = ssub.s32 %s17, %s24
    %p58 = scmp.eq.s32.totalorder %s57, 0
    %s60 = sadd.s32 %s59, 1
    %s61 = scalar_select %p58, %s59, %s60
    %p64 = pneg %p58
    %p65 = scmp.eq.s32.totalorder %s9, 1
    %p66 = por %p64, %p65
    %p67 = scmp.ne.s32.totalorder %s59, %s62
    %p68 = scmp.eq.s32.totalorder %s9, 0
    %p69 = por %p67, %p68
    %p70 = scmp.ne.s32.totalorder %s59, %s62
    %p71 = scmp.eq.s32.totalorder %s14, 1
    %p72 = por %p70, %p71
    %p73 = scmp.ne.s32.totalorder %s62, %s63
    %p74 = scmp.eq.s32.totalorder %s14, 0
    %p75 = por %p73, %p74
    %p76 = scmp.ne.s32.totalorder %s62, %s63
    %p77 = scmp.eq.s32.totalorder %s15, 1
    %p78 = por %p76, %p77
    %p80 = scmp.ne.s32.totalorder %s63, %s79
    %p81 = scmp.eq.s32.totalorder %s15, 0
    %p82 = por %p80, %p81
    %s84 = sadd.s32 %s83, 1
    %p87 = scmp.eq.s32.totalorder %s9, 1
    %p88 = scmp.ne.s32.totalorder %s83, %s85
    %p89 = scmp.eq.s32.totalorder %s9, 0
    %p90 = por %p88, %p89
    %p91 = scmp.ne.s32.totalorder %s83, %s85
    %p92 = scmp.eq.s32.totalorder %s14, 1
    %p93 = por %p91, %p92
    %p94 = scmp.ne.s32.totalorder %s85, %s86
    %p95 = scmp.eq.s32.totalorder %s14, 0
    %p96 = por %p94, %p95
    %p97 = scmp.ne.s32.totalorder %s85, %s86
    %p98 = scmp.eq.s32.totalorder %s15, 1
    %p99 = por %p97, %p98
    %p101 = scmp.ne.s32.totalorder %s86, %s100
    %p102 = scmp.eq.s32.totalorder %s15, 0
    %p103 = por %p101, %p102
    %s104 = ssub.s32 %s16, %s28
    %p105 = scmp.eq.s32.totalorder %s104, 0
    %s107 = sadd.s32 %s106, 1
    %s108 = scalar_select %p105, %s106, %s107
    %p111 = pneg %p105
    %p112 = scmp.eq.s32.totalorder %s9, 1
    %p113 = por %p111, %p112
    %p114 = scmp.ne.s32.totalorder %s106, %s109
    %p115 = scmp.eq.s32.totalorder %s9, 0
    %p116 = por %p114, %p115
    %p117 = scmp.ne.s32.totalorder %s106, %s109
    %p118 = scmp.eq.s32.totalorder %s14, 1
    %p119 = por %p117, %p118
    %p120 = scmp.ne.s32.totalorder %s109, %s110
    %p121 = scmp.eq.s32.totalorder %s14, 0
    %p122 = por %p120, %p121
    %p123 = scmp.ne.s32.totalorder %s109, %s110
    %p124 = scmp.eq.s32.totalorder %s15, 1
    %p125 = por %p123, %p124
    %p127 = scmp.ne.s32.totalorder %s110, %s126
    %p128 = scmp.eq.s32.totalorder %s15, 0
    %p129 = por %p127, %p128
    %p130 = scmp.le.s32.totalorder 1, %s9
    %p131 = scmp.lt.s32.totalorder %s9, 3
    %p132 = pnand %p130, %p131
    %p133 = pneg %p132
    // Predicated region
    $region9: #{patch_embed.1} parent=5 // pred_check
      _
    $region10: #{patch_embed.1} parent=5 // pred_check_branch
      %135 = sbr.rel (%p132) target = $region12
    $region11: #{patch_embed.1} parent=5 // pred_region
      %s136 = ssub.s32 %s9, 1
      // Predicated region
      $region13: #{patch_embed.1} parent=11 // pred_check
        %p137 = pneg %p75
      $region14: #{patch_embed.1} parent=11 // pred_check_branch
        %139 = sbr.rel (%p137) target = $region16
      $region15: #{patch_embed.1} parent=11 // pred_region
        %s140 = smul.u32 4, %s19
        %p141 = scmp.lt.s32.totalorder %s140, 3
        %s142 = scalar_select %p141, %s140, 3
        %s143 = smul.addr %s142, 4
        %s144 = scalar_lea.vmem %s1, %s143
        %s145 = smul.u32 4, %s19
      $region16: #{patch_embed.1} parent=11 // pred_fallthru
        _
      // Predicated region
      $region17: #{patch_embed.1} parent=11 // pred_check
        %p146 = pneg %p96
      $region18: #{patch_embed.1} parent=11 // pred_check_branch
        %148 = sbr.rel (%p146) target = $region20
      $region19: #{patch_embed.1} parent=11 // pred_region
        _
      $region20: #{patch_embed.1} parent=11 // pred_fallthru
        _
    $region12: #{patch_embed.1} parent=5 // pred_fallthru
      _
    %p149 = scmp.lt.s32.totalorder %s9, 2
    // Predicated region
    $region21: #{patch_embed.1} parent=5 // pred_check
      %p150 = pneg %p149
    $region22: #{patch_embed.1} parent=5 // pred_check_branch
      %152 = sbr.rel (%p150) target = $region24
    $region23: #{patch_embed.1} parent=5 // pred_region
      // Predicated region
      $region25: #{patch_embed.1} parent=23 // pred_check
        %p153 = pneg %p43
      $region26: #{patch_embed.1} parent=23 // pred_check_branch
        %155 = sbr.rel (%p153) target = $region28
      $region27: #{patch_embed.1} parent=23 // pred_region
        %s156 = smul.u32 32, %s16
        %p157 = scmp.lt.s32.totalorder %s156, 63
        %s158 = scalar_select %p157, %s156, 63
        %p159 = scmp.lt.s32.totalorder %s17, 0
        %s160 = scalar_select %p159, %s17, 0
        %s161 = sadd.s32 %s160, %s158
        %s162 = smul.addr %s161, 4
        %s163 = scalar_lea.vmem %s0, %s162
        %s164 = smul.u32 32, %s16
      $region28: #{patch_embed.1} parent=23 // pred_fallthru
        _
    $region24: #{patch_embed.1} parent=5 // pred_fallthru
      _
    %p165 = scmp.le.s32.totalorder 1, %s9
    %p166 = scmp.lt.s32.totalorder %s9, 3
    %p167 = pnand %p165, %p166
    %p168 = pneg %p167
    // Predicated region
    $region29: #{patch_embed.1} parent=5 // pred_check
      _
    $region30: #{patch_embed.1} parent=5 // pred_check_branch
      %170 = sbr.rel (%p167) target = $region32
    $region31: #{patch_embed.1} parent=5 // pred_region
      %s171 = ssub.s32 %s9, 1
      %s172 = smul.u32 32, %s18
      %p173 = scmp.lt.s32.totalorder %s172, 63
      %s174 = scalar_select %p173, %s172, 63
      %p175 = scmp.lt.s32.totalorder %s19, 0
      %s176 = scalar_select %p175, %s19, 0
      %s177 = sadd.s32 %s176, %s174
      %s178 = smul.addr %s177, 4
      %s179 = scalar_lea.vmem %s0, %s178
      %p180 = pneg %p49
      %p181 = pneg %p46
      %s182 = smul.u32 4, %s19
      %p183 = scmp.lt.s32.totalorder %s182, 3
      %s184 = scalar_select %p183, %s182, 3
      %s185 = smul.addr %s184, 4
      %s186 = scalar_lea.vmem %s1, %s185
      %p187 = pneg %p75
      %p188 = pneg %p72
      %p189 = pneg %p96
      %p190 = pneg %p93
      %p191 = pneg %p122
      %p192 = pneg %p119
      %s193 = smul.u32 32, %s18
      %p194 = scmp.lt.s32.totalorder %s193, 63
      %s195 = scalar_select %p194, %s193, 63
      %s196 = smul.addr %s195, 8
      %s197 = scalar_lea.vmem %s3, %s196
      %s198 = smul.u32 32, %s18
      %p199 = scmp.lt.s32.totalorder %s198, 63
      %s200 = scalar_select %p199, %s198, 63
      %p201 = scmp.lt.s32.totalorder %s19, 0
      %s202 = scalar_select %p201, %s19, 0
      %s203 = sadd.s32 %s202, %s200
      %s204 = smul.addr %s203, 4
      %s205 = scalar_lea.vmem %s0, %s204
      %s206 = smul.u32 32, %s18
      %s207 = smul.u32 4, %s19
      %p208 = scmp.lt.s32.totalorder %s207, 3
      %s209 = scalar_select %p208, %s207, 3
      %s210 = smul.addr %s209, 4
      %s211 = scalar_lea.vmem %s1, %s210
      %s212 = smul.u32 4, %s19
      %s213 = smul.u32 32, %s18
      %p214 = scmp.lt.s32.totalorder %s213, 63
      %s215 = scalar_select %p214, %s213, 63
      %s216 = smul.addr %s215, 8
      %s217 = scalar_lea.vmem %s3, %s216
      %s218 = smul.u32 32, %s18
      %p220 = scmp.eq.s32.totalorder %s19, 0
      // Predicated region
      $region33: #{patch_embed.1} parent=31 // pred_check
        %p221 = pneg %p220
      $region34: #{patch_embed.1} parent=31 // pred_check_branch
        %223 = sbr.rel (%p221) target = $region36
      $region35: #{patch_embed.1} parent=31 // pred_region
        %224 = vst [vmem:[#allocation2] sm:$0xff] 0.0
        %225 = vst [vmem:[#allocation2 + $0x8] sm:$0xff] 0.0
        %226 = vst [vmem:[#allocation2 + $0x10] sm:$0xff] 0.0
        %227 = vst [vmem:[#allocation2 + $0x18] sm:$0xff] 0.0
        %228 = vst [vmem:[#allocation2 + $0x20] sm:$0xff] 0.0
        %229 = vst [vmem:[#allocation2 + $0x28] sm:$0xff] 0.0
        %230 = vst [vmem:[#allocation2 + $0x30] sm:$0xff] 0.0
        %231 = vst [vmem:[#allocation2 + $0x38] sm:$0xff] 0.0
        %232 = vst [vmem:[#allocation2 + $0x40] sm:$0xff] 0.0
        %233 = vst [vmem:[#allocation2 + $0x48] sm:$0xff] 0.0
        %234 = vst [vmem:[#allocation2 + $0x50] sm:$0xff] 0.0
        %235 = vst [vmem:[#allocation2 + $0x58] sm:$0xff] 0.0
        %236 = vst [vmem:[#allocation2 + $0x60] sm:$0xff] 0.0
        %237 = vst [vmem:[#allocation2 + $0x68] sm:$0xff] 0.0
        %238 = vst [vmem:[#allocation2 + $0x70] sm:$0xff] 0.0
        %239 = vst [vmem:[#allocation2 + $0x78] sm:$0xff] 0.0
        %240 = vst [vmem:[#allocation2 + $0x80] sm:$0xff] 0.0
        %241 = vst [vmem:[#allocation2 + $0x88] sm:$0xff] 0.0
        %242 = vst [vmem:[#allocation2 + $0x90] sm:$0xff] 0.0
        %243 = vst [vmem:[#allocation2 + $0x98] sm:$0xff] 0.0
        %244 = vst [vmem:[#allocation2 + $0xa0] sm:$0xff] 0.0
        %245 = vst [vmem:[#allocation2 + $0xa8] sm:$0xff] 0.0
        %246 = vst [vmem:[#allocation2 + $0xb0] sm:$0xff] 0.0
        %247 = vst [vmem:[#allocation2 + $0xb8] sm:$0xff] 0.0
        %248 = vst [vmem:[#allocation2 + $0xc0] sm:$0xff] 0.0
        %249 = vst [vmem:[#allocation2 + $0xc8] sm:$0xff] 0.0
        %250 = vst [vmem:[#allocation2 + $0xd0] sm:$0xff] 0.0
        %251 = vst [vmem:[#allocation2 + $0xd8] sm:$0xff] 0.0
        %252 = vst [vmem:[#allocation2 + $0xe0] sm:$0xff] 0.0
        %253 = vst [vmem:[#allocation2 + $0xe8] sm:$0xff] 0.0
        %254 = vst [vmem:[#allocation2 + $0xf0] sm:$0xff] 0.0
        %255 = vst [vmem:[#allocation2 + $0xf8] sm:$0xff] 0.0
      $region36: #{patch_embed.1} parent=31 // pred_fallthru
        _
      %v256 = vld [vmem:[#allocation2] sm:$0xff]
      %v257 = vld [vmem:[#allocation2 + $0x8] sm:$0xff]
      %v258 = vld [vmem:[#allocation2 + $0x10] sm:$0xff]
      %v259 = vld [vmem:[#allocation2 + $0x18] sm:$0xff]
      %v260 = vld [vmem:[#allocation2 + $0x20] sm:$0xff]
      %v261 = vld [vmem:[#allocation2 + $0x28] sm:$0xff]
      %v262 = vld [vmem:[#allocation2 + $0x30] sm:$0xff]
      %v263 = vld [vmem:[#allocation2 + $0x38] sm:$0xff]
      %v264 = vld [vmem:[#allocation2 + $0x40] sm:$0xff]
      %v265 = vld [vmem:[#allocation2 + $0x48] sm:$0xff]
      %v266 = vld [vmem:[#allocation2 + $0x50] sm:$0xff]
      %v267 = vld [vmem:[#allocation2 + $0x58] sm:$0xff]
      %v268 = vld [vmem:[#allocation2 + $0x60] sm:$0xff]
      %v269 = vld [vmem:[#allocation2 + $0x68] sm:$0xff]
      %v270 = vld [vmem:[#allocation2 + $0x70] sm:$0xff]
      %v271 = vld [vmem:[#allocation2 + $0x78] sm:$0xff]
      %v272 = vld [vmem:[#allocation2 + $0x80] sm:$0xff]
      %v273 = vld [vmem:[#allocation2 + $0x88] sm:$0xff]
      %v274 = vld [vmem:[#allocation2 + $0x90] sm:$0xff]
      %v275 = vld [vmem:[#allocation2 + $0x98] sm:$0xff]
      %v276 = vld [vmem:[#allocation2 + $0xa0] sm:$0xff]
      %v277 = vld [vmem:[#allocation2 + $0xa8] sm:$0xff]
      %v278 = vld [vmem:[#allocation2 + $0xb0] sm:$0xff]
      %v279 = vld [vmem:[#allocation2 + $0xb8] sm:$0xff]
      %v280 = vld [vmem:[#allocation2 + $0xc0] sm:$0xff]
      %v281 = vld [vmem:[#allocation2 + $0xc8] sm:$0xff]
      %v282 = vld [vmem:[#allocation2 + $0xd0] sm:$0xff]
      %v283 = vld [vmem:[#allocation2 + $0xd8] sm:$0xff]
      %v284 = vld [vmem:[#allocation2 + $0xe0] sm:$0xff]
      %v285 = vld [vmem:[#allocation2 + $0xe8] sm:$0xff]
      %v286 = vld [vmem:[#allocation2 + $0xf0] sm:$0xff]
      %v287 = vld [vmem:[#allocation2 + $0xf8] sm:$0xff]
      %v288 = vld [vmem:[%s205] sm:$0xf]
      %v289 = vld [vmem:[%s205 + $0x4] sm:$0xf]
      %v290 = vld [vmem:[%s205 + $0x8] sm:$0xf]
      %v291 = vld [vmem:[%s205 + $0xc] sm:$0xf]
      %v292 = vld [vmem:[%s205 + $0x10] sm:$0xf]
      %v293 = vld [vmem:[%s205 + $0x14] sm:$0xf]
      %v294 = vld [vmem:[%s205 + $0x18] sm:$0xf]
      %v295 = vld [vmem:[%s205 + $0x1c] sm:$0xf]
      %v296 = vld [vmem:[%s205 + $0x20] sm:$0xf]
      %v297 = vld [vmem:[%s205 + $0x24] sm:$0xf]
      %v298 = vld [vmem:[%s205 + $0x28] sm:$0xf]
      %v299 = vld [vmem:[%s205 + $0x2c] sm:$0xf]
      %v300 = vld [vmem:[%s205 + $0x30] sm:$0xf]
      %v301 = vld [vmem:[%s205 + $0x34] sm:$0xf]
      %v302 = vld [vmem:[%s205 + $0x38] sm:$0xf]
      %v303 = vld [vmem:[%s205 + $0x3c] sm:$0xf]
      %v304 = vld [vmem:[%s205 + $0x40] sm:$0xf]
      %v305 = vld [vmem:[%s205 + $0x44] sm:$0xf]
      %v306 = vld [vmem:[%s205 + $0x48] sm:$0xf]
      %v307 = vld [vmem:[%s205 + $0x4c] sm:$0xf]
      %v308 = vld [vmem:[%s205 + $0x50] sm:$0xf]
      %v309 = vld [vmem:[%s205 + $0x54] sm:$0xf]
      %v310 = vld [vmem:[%s205 + $0x58] sm:$0xf]
      %v311 = vld [vmem:[%s205 + $0x5c] sm:$0xf]
      %v312 = vld [vmem:[%s205 + $0x60] sm:$0xf]
      %v313 = vld [vmem:[%s205 + $0x64] sm:$0xf]
      %v314 = vld [vmem:[%s205 + $0x68] sm:$0xf]
      %v315 = vld [vmem:[%s205 + $0x6c] sm:$0xf]
      %v316 = vld [vmem:[%s205 + $0x70] sm:$0xf]
      %v317 = vld [vmem:[%s205 + $0x74] sm:$0xf]
      %v318 = vld [vmem:[%s205 + $0x78] sm:$0xf]
      %v319 = vld [vmem:[%s205 + $0x7c] sm:$0xf]
      %v320 = vld [vmem:[%s211] sm:$0xf]
      %v321 = vld [vmem:[%s211 + $0x4] sm:$0xf]
      %v322 = vld [vmem:[%s211 + $0x8] sm:$0xf]
      %v323 = vld [vmem:[%s211 + $0xc] sm:$0xf]
      %v356 = vunpack.c.l.b16 %v288
      %v357 = vunpack.c.l.b16 %v289
      %v358 = vunpack.c.l.b16 %v290
      %v359 = vunpack.c.l.b16 %v291
      %v360 = vunpack.c.l.b16 %v292
      %v361 = vunpack.c.l.b16 %v293
      %v362 = vunpack.c.l.b16 %v294
      %v363 = vunpack.c.l.b16 %v295
      %v364 = vunpack.c.l.b16 %v296
      %v365 = vunpack.c.l.b16 %v297
      %v366 = vunpack.c.l.b16 %v298
      %v367 = vunpack.c.l.b16 %v299
      %v368 = vunpack.c.l.b16 %v300
      %v369 = vunpack.c.l.b16 %v301
      %v370 = vunpack.c.l.b16 %v302
      %v371 = vunpack.c.l.b16 %v303
      %v372 = vunpack.c.l.b16 %v304
      %v373 = vunpack.c.l.b16 %v305
      %v374 = vunpack.c.l.b16 %v306
      %v375 = vunpack.c.l.b16 %v307
      %v376 = vunpack.c.l.b16 %v308
      %v377 = vunpack.c.l.b16 %v309
      %v378 = vunpack.c.l.b16 %v310
      %v379 = vunpack.c.l.b16 %v311
      %v380 = vunpack.c.l.b16 %v312
      %v381 = vunpack.c.l.b16 %v313
      %v382 = vunpack.c.l.b16 %v314
      %v383 = vunpack.c.l.b16 %v315
      %v384 = vunpack.c.l.b16 %v316
      %v385 = vunpack.c.l.b16 %v317
      %v386 = vunpack.c.l.b16 %v318
      %v387 = vunpack.c.l.b16 %v319
      %v388 = vpack.c.b16 %v357, %v356
      %v389 = vpack.c.b16 %v359, %v358
      %v390 = vpack.c.b16 %v361, %v360
      %v391 = vpack.c.b16 %v363, %v362
      %v392 = vpack.c.b16 %v365, %v364
      %v393 = vpack.c.b16 %v367, %v366
      %v394 = vpack.c.b16 %v369, %v368
      %v395 = vpack.c.b16 %v371, %v370
      %v396 = vpack.c.b16 %v373, %v372
      %v397 = vpack.c.b16 %v375, %v374
      %v398 = vpack.c.b16 %v377, %v376
      %v399 = vpack.c.b16 %v379, %v378
      %v400 = vpack.c.b16 %v381, %v380
      %v401 = vpack.c.b16 %v383, %v382
      %v402 = vpack.c.b16 %v385, %v384
      %v403 = vpack.c.b16 %v387, %v386
      %v408 = vunpack.c.l.b16 %v320
      %v409 = vunpack.c.l.b16 %v321
      %v410 = vunpack.c.l.b16 %v322
      %v411 = vunpack.c.l.b16 %v323
      %v412 = vpack.c.b16 %v409, %v408
      %v413 = vpack.c.b16 %v411, %v410
      %vm416 = vcmask 261120
      %v418 = vsel %vm416, %v388, 0
      %v421 = vsel %vm416, %v389, 0
      %v424 = vsel %vm416, %v390, 0
      %v427 = vsel %vm416, %v391, 0
      %v430 = vsel %vm416, %v392, 0
      %v433 = vsel %vm416, %v393, 0
      %v436 = vsel %vm416, %v394, 0
      %v439 = vsel %vm416, %v395, 0
      %v442 = vsel %vm416, %v396, 0
      %v445 = vsel %vm416, %v397, 0
      %v448 = vsel %vm416, %v398, 0
      %v451 = vsel %vm416, %v399, 0
      %v454 = vsel %vm416, %v400, 0
      %v457 = vsel %vm416, %v401, 0
      %v460 = vsel %vm416, %v402, 0
      %v463 = vsel %vm416, %v403, 0
      %465 = vmatpush.bf16.msra.mxu0 0
      %466 = vmatpush.bf16.msra.mxu0 0
      %467 = vmatpush.bf16.msra.mxu0 0
      %468 = vmatpush.bf16.msra.mxu0 0
      %469 = vmatpush.bf16.msra.mxu0 0
      %470 = vmatpush.bf16.msra.mxu0 0
      %471 = vmatpush.bf16.msra.mxu0 %v413
      %472 = vmatpush.bf16.msra.mxu0 %v412
      %473 = vmatmul.bf16.gmra.mxu0 %v418
      %v474 = vpop.f32.mrf.mxu0
      %v475 = vadd.f32 0.0, %v474
      %v476 = vpop.f32.mrf.mxu0
      %v477 = vadd.f32 0.0, %v476
      %478 = vmatmul.bf16.gmra.mxu0 %v421
      %v479 = vpop.f32.mrf.mxu0
      %v480 = vadd.f32 0.0, %v479
      %v481 = vpop.f32.mrf.mxu0
      %v482 = vadd.f32 0.0, %v481
      %483 = vmatmul.bf16.gmra.mxu0 %v424
      %v484 = vpop.f32.mrf.mxu0
      %v485 = vadd.f32 0.0, %v484
      %v486 = vpop.f32.mrf.mxu0
      %v487 = vadd.f32 0.0, %v486
      %488 = vmatmul.bf16.gmra.mxu0 %v427
      %v489 = vpop.f32.mrf.mxu0
      %v490 = vadd.f32 0.0, %v489
      %v491 = vpop.f32.mrf.mxu0
      %v492 = vadd.f32 0.0, %v491
      %493 = vmatmul.bf16.gmra.mxu0 %v430
      %v494 = vpop.f32.mrf.mxu0
      %v495 = vadd.f32 0.0, %v494
      %v496 = vpop.f32.mrf.mxu0
      %v497 = vadd.f32 0.0, %v496
      %498 = vmatmul.bf16.gmra.mxu0 %v433
      %v499 = vpop.f32.mrf.mxu0
      %v500 = vadd.f32 0.0, %v499
      %v501 = vpop.f32.mrf.mxu0
      %v502 = vadd.f32 0.0, %v501
      %503 = vmatmul.bf16.gmra.mxu0 %v436
      %v504 = vpop.f32.mrf.mxu0
      %v505 = vadd.f32 0.0, %v504
      %v506 = vpop.f32.mrf.mxu0
      %v507 = vadd.f32 0.0, %v506
      %508 = vmatmul.bf16.gmra.mxu0 %v439
      %v509 = vpop.f32.mrf.mxu0
      %v510 = vadd.f32 0.0, %v509
      %v511 = vpop.f32.mrf.mxu0
      %v512 = vadd.f32 0.0, %v511
      %513 = vmatmul.bf16.gmra.mxu0 %v442
      %v514 = vpop.f32.mrf.mxu0
      %v515 = vadd.f32 0.0, %v514
      %v516 = vpop.f32.mrf.mxu0
      %v517 = vadd.f32 0.0, %v516
      %518 = vmatmul.bf16.gmra.mxu0 %v445
      %v519 = vpop.f32.mrf.mxu0
      %v520 = vadd.f32 0.0, %v519
      %v521 = vpop.f32.mrf.mxu0
      %v522 = vadd.f32 0.0, %v521
      %523 = vmatmul.bf16.gmra.mxu0 %v448
      %v524 = vpop.f32.mrf.mxu0
      %v525 = vadd.f32 0.0, %v524
      %v526 = vpop.f32.mrf.mxu0
      %v527 = vadd.f32 0.0, %v526
      %528 = vmatmul.bf16.gmra.mxu0 %v451
      %v529 = vpop.f32.mrf.mxu0
      %v530 = vadd.f32 0.0, %v529
      %v531 = vpop.f32.mrf.mxu0
      %v532 = vadd.f32 0.0, %v531
      %533 = vmatmul.bf16.gmra.mxu0 %v454
      %v534 = vpop.f32.mrf.mxu0
      %v535 = vadd.f32 0.0, %v534
      %v536 = vpop.f32.mrf.mxu0
      %v537 = vadd.f32 0.0, %v536
      %538 = vmatmul.bf16.gmra.mxu0 %v457
      %v539 = vpop.f32.mrf.mxu0
      %v540 = vadd.f32 0.0, %v539
      %v541 = vpop.f32.mrf.mxu0
      %v542 = vadd.f32 0.0, %v541
      %543 = vmatmul.bf16.gmra.mxu0 %v460
      %v544 = vpop.f32.mrf.mxu0
      %v545 = vadd.f32 0.0, %v544
      %v546 = vpop.f32.mrf.mxu0
      %v547 = vadd.f32 0.0, %v546
      %548 = vmatmul.bf16.gmra.mxu0 %v463
      %v549 = vpop.f32.mrf.mxu0
      %v550 = vadd.f32 0.0, %v549
      %v551 = vpop.f32.mrf.mxu0
      %v552 = vadd.f32 0.0, %v551
      %553 = vdwg.mxu0
      %v554 = vadd.f32 %v256, %v475
      %v555 = vadd.f32 %v257, %v477
      %v556 = vadd.f32 %v258, %v480
      %v557 = vadd.f32 %v259, %v482
      %v558 = vadd.f32 %v260, %v485
      %v559 = vadd.f32 %v261, %v487
      %v560 = vadd.f32 %v262, %v490
      %v561 = vadd.f32 %v263, %v492
      %v562 = vadd.f32 %v264, %v495
      %v563 = vadd.f32 %v265, %v497
      %v564 = vadd.f32 %v266, %v500
      %v565 = vadd.f32 %v267, %v502
      %v566 = vadd.f32 %v268, %v505
      %v567 = vadd.f32 %v269, %v507
      %v568 = vadd.f32 %v270, %v510
      %v569 = vadd.f32 %v271, %v512
      %v570 = vadd.f32 %v272, %v515
      %v571 = vadd.f32 %v273, %v517
      %v572 = vadd.f32 %v274, %v520
      %v573 = vadd.f32 %v275, %v522
      %v574 = vadd.f32 %v276, %v525
      %v575 = vadd.f32 %v277, %v527
      %v576 = vadd.f32 %v278, %v530
      %v577 = vadd.f32 %v279, %v532
      %v578 = vadd.f32 %v280, %v535
      %v579 = vadd.f32 %v281, %v537
      %v580 = vadd.f32 %v282, %v540
      %v581 = vadd.f32 %v283, %v542
      %v582 = vadd.f32 %v284, %v545
      %v583 = vadd.f32 %v285, %v547
      %v584 = vadd.f32 %v286, %v550
      %v585 = vadd.f32 %v287, %v552
      %586 = vst [vmem:[#allocation2] sm:$0xff] %v554
      %587 = vst [vmem:[#allocation2 + $0x8] sm:$0xff] %v555
      %588 = vst [vmem:[#allocation2 + $0x10] sm:$0xff] %v556
      %589 = vst [vmem:[#allocation2 + $0x18] sm:$0xff] %v557
      %590 = vst [vmem:[#allocation2 + $0x20] sm:$0xff] %v558
      %591 = vst [vmem:[#allocation2 + $0x28] sm:$0xff] %v559
      %592 = vst [vmem:[#allocation2 + $0x30] sm:$0xff] %v560
      %593 = vst [vmem:[#allocation2 + $0x38] sm:$0xff] %v561
      %594 = vst [vmem:[#allocation2 + $0x40] sm:$0xff] %v562
      %595 = vst [vmem:[#allocation2 + $0x48] sm:$0xff] %v563
      %596 = vst [vmem:[#allocation2 + $0x50] sm:$0xff] %v564
      %597 = vst [vmem:[#allocation2 + $0x58] sm:$0xff] %v565
      %598 = vst [vmem:[#allocation2 + $0x60] sm:$0xff] %v566
      %599 = vst [vmem:[#allocation2 + $0x68] sm:$0xff] %v567
      %600 = vst [vmem:[#allocation2 + $0x70] sm:$0xff] %v568
      %601 = vst [vmem:[#allocation2 + $0x78] sm:$0xff] %v569
      %602 = vst [vmem:[#allocation2 + $0x80] sm:$0xff] %v570
      %603 = vst [vmem:[#allocation2 + $0x88] sm:$0xff] %v571
      %604 = vst [vmem:[#allocation2 + $0x90] sm:$0xff] %v572
      %605 = vst [vmem:[#allocation2 + $0x98] sm:$0xff] %v573
      %606 = vst [vmem:[#allocation2 + $0xa0] sm:$0xff] %v574
      %607 = vst [vmem:[#allocation2 + $0xa8] sm:$0xff] %v575
      %608 = vst [vmem:[#allocation2 + $0xb0] sm:$0xff] %v576
      %609 = vst [vmem:[#allocation2 + $0xb8] sm:$0xff] %v577
      %610 = vst [vmem:[#allocation2 + $0xc0] sm:$0xff] %v578
      %611 = vst [vmem:[#allocation2 + $0xc8] sm:$0xff] %v579
      %612 = vst [vmem:[#allocation2 + $0xd0] sm:$0xff] %v580
      %613 = vst [vmem:[#allocation2 + $0xd8] sm:$0xff] %v581
      %614 = vst [vmem:[#allocation2 + $0xe0] sm:$0xff] %v582
      %615 = vst [vmem:[#allocation2 + $0xe8] sm:$0xff] %v583
      %616 = vst [vmem:[#allocation2 + $0xf0] sm:$0xff] %v584
      %617 = vst [vmem:[#allocation2 + $0xf8] sm:$0xff] %v585
      // Predicated region
      $region37: #{patch_embed.1} parent=31 // pred_check
        %p618 = pneg %p220
      $region38: #{patch_embed.1} parent=31 // pred_check_branch
        %620 = sbr.rel (%p618) target = $region40
      $region39: #{patch_embed.1} parent=31 // pred_region
        %v621 = vld [vmem:[#allocation2] sm:$0xff]
        %v622 = vld [vmem:[#allocation2 + $0x8] sm:$0xff]
        %v623 = vld [vmem:[#allocation2 + $0x10] sm:$0xff]
        %v624 = vld [vmem:[#allocation2 + $0x18] sm:$0xff]
        %v625 = vld [vmem:[#allocation2 + $0x20] sm:$0xff]
        %v626 = vld [vmem:[#allocation2 + $0x28] sm:$0xff]
        %v627 = vld [vmem:[#allocation2 + $0x30] sm:$0xff]
        %v628 = vld [vmem:[#allocation2 + $0x38] sm:$0xff]
        %v629 = vld [vmem:[#allocation2 + $0x40] sm:$0xff]
        %v630 = vld [vmem:[#allocation2 + $0x48] sm:$0xff]
        %v631 = vld [vmem:[#allocation2 + $0x50] sm:$0xff]
        %v632 = vld [vmem:[#allocation2 + $0x58] sm:$0xff]
        %v633 = vld [vmem:[#allocation2 + $0x60] sm:$0xff]
        %v634 = vld [vmem:[#allocation2 + $0x68] sm:$0xff]
        %v635 = vld [vmem:[#allocation2 + $0x70] sm:$0xff]
        %v636 = vld [vmem:[#allocation2 + $0x78] sm:$0xff]
        %v637 = vld [vmem:[#allocation2 + $0x80] sm:$0xff]
        %v638 = vld [vmem:[#allocation2 + $0x88] sm:$0xff]
        %v639 = vld [vmem:[#allocation2 + $0x90] sm:$0xff]
        %v640 = vld [vmem:[#allocation2 + $0x98] sm:$0xff]
        %v641 = vld [vmem:[#allocation2 + $0xa0] sm:$0xff]
        %v642 = vld [vmem:[#allocation2 + $0xa8] sm:$0xff]
        %v643 = vld [vmem:[#allocation2 + $0xb0] sm:$0xff]
        %v644 = vld [vmem:[#allocation2 + $0xb8] sm:$0xff]
        %v645 = vld [vmem:[#allocation2 + $0xc0] sm:$0xff]
        %v646 = vld [vmem:[#allocation2 + $0xc8] sm:$0xff]
        %v647 = vld [vmem:[#allocation2 + $0xd0] sm:$0xff]
        %v648 = vld [vmem:[#allocation2 + $0xd8] sm:$0xff]
        %v649 = vld [vmem:[#allocation2 + $0xe0] sm:$0xff]
        %v650 = vld [vmem:[#allocation2 + $0xe8] sm:$0xff]
        %v651 = vld [vmem:[#allocation2 + $0xf0] sm:$0xff]
        %v652 = vld [vmem:[#allocation2 + $0xf8] sm:$0xff]
        %v653 = vld [vmem:[%s2] sm:$0x1]
        %v655 = vperm.slane %v653, 0
        %v657 = vadd.f32 %v621, %v655
        %v658 = vadd.f32 %v622, %v655
        %v659 = vadd.f32 %v623, %v655
        %v660 = vadd.f32 %v624, %v655
        %v661 = vadd.f32 %v625, %v655
        %v662 = vadd.f32 %v626, %v655
        %v663 = vadd.f32 %v627, %v655
        %v664 = vadd.f32 %v628, %v655
        %v665 = vadd.f32 %v629, %v655
        %v666 = vadd.f32 %v630, %v655
        %v667 = vadd.f32 %v631, %v655
        %v668 = vadd.f32 %v632, %v655
        %v669 = vadd.f32 %v633, %v655
        %v670 = vadd.f32 %v634, %v655
        %v671 = vadd.f32 %v635, %v655
        %v672 = vadd.f32 %v636, %v655
        %v673 = vadd.f32 %v637, %v655
        %v674 = vadd.f32 %v638, %v655
        %v675 = vadd.f32 %v639, %v655
        %v676 = vadd.f32 %v640, %v655
        %v677 = vadd.f32 %v641, %v655
        %v678 = vadd.f32 %v642, %v655
        %v679 = vadd.f32 %v643, %v655
        %v680 = vadd.f32 %v644, %v655
        %v681 = vadd.f32 %v645, %v655
        %v682 = vadd.f32 %v646, %v655
        %v683 = vadd.f32 %v647, %v655
        %v684 = vadd.f32 %v648, %v655
        %v685 = vadd.f32 %v649, %v655
        %v686 = vadd.f32 %v650, %v655
        %v687 = vadd.f32 %v651, %v655
        %v688 = vadd.f32 %v652, %v655
        %689 = vst [vmem:[%s217] sm:$0xff] %v657
        %690 = vst [vmem:[%s217 + $0x8] sm:$0xff] %v658
        %691 = vst [vmem:[%s217 + $0x10] sm:$0xff] %v659
        %692 = vst [vmem:[%s217 + $0x18] sm:$0xff] %v660
        %693 = vst [vmem:[%s217 + $0x20] sm:$0xff] %v661
        %694 = vst [vmem:[%s217 + $0x28] sm:$0xff] %v662
        %695 = vst [vmem:[%s217 + $0x30] sm:$0xff] %v663
        %696 = vst [vmem:[%s217 + $0x38] sm:$0xff] %v664
        %697 = vst [vmem:[%s217 + $0x40] sm:$0xff] %v665
        %698 = vst [vmem:[%s217 + $0x48] sm:$0xff] %v666
        %699 = vst [vmem:[%s217 + $0x50] sm:$0xff] %v667
        %700 = vst [vmem:[%s217 + $0x58] sm:$0xff] %v668
        %701 = vst [vmem:[%s217 + $0x60] sm:$0xff] %v669
        %702 = vst [vmem:[%s217 + $0x68] sm:$0xff] %v670
        %703 = vst [vmem:[%s217 + $0x70] sm:$0xff] %v671
        %704 = vst [vmem:[%s217 + $0x78] sm:$0xff] %v672
        %705 = vst [vmem:[%s217 + $0x80] sm:$0xff] %v673
        %706 = vst [vmem:[%s217 + $0x88] sm:$0xff] %v674
        %707 = vst [vmem:[%s217 + $0x90] sm:$0xff] %v675
        %708 = vst [vmem:[%s217 + $0x98] sm:$0xff] %v676
        %709 = vst [vmem:[%s217 + $0xa0] sm:$0xff] %v677
        %710 = vst [vmem:[%s217 + $0xa8] sm:$0xff] %v678
        %711 = vst [vmem:[%s217 + $0xb0] sm:$0xff] %v679
        %712 = vst [vmem:[%s217 + $0xb8] sm:$0xff] %v680
        %713 = vst [vmem:[%s217 + $0xc0] sm:$0xff] %v681
        %714 = vst [vmem:[%s217 + $0xc8] sm:$0xff] %v682
        %715 = vst [vmem:[%s217 + $0xd0] sm:$0xff] %v683
        %716 = vst [vmem:[%s217 + $0xd8] sm:$0xff] %v684
        %717 = vst [vmem:[%s217 + $0xe0] sm:$0xff] %v685
        %718 = vst [vmem:[%s217 + $0xe8] sm:$0xff] %v686
        %719 = vst [vmem:[%s217 + $0xf0] sm:$0xff] %v687
        %720 = vst [vmem:[%s217 + $0xf8] sm:$0xff] %v688
      $region40: #{patch_embed.1} parent=31 // pred_fallthru
        _
      %s721 = smul.u32 32, %s18
      %p722 = scmp.lt.s32.totalorder %s721, 63
      %s723 = scalar_select %p722, %s721, 63
      %s724 = smul.addr %s723, 8
      %s725 = scalar_lea.vmem %s3, %s724
      // Predicated region
      $region41: #{patch_embed.1} parent=31 // pred_check
        %p726 = pneg %p119
      $region42: #{patch_embed.1} parent=31 // pred_check_branch
        %728 = sbr.rel (%p726) target = $region44
      $region43: #{patch_embed.1} parent=31 // pred_region
        %s729 = smul.u32 32, %s18
      $region44: #{patch_embed.1} parent=31 // pred_fallthru
        _
    $region32: #{patch_embed.1} parent=5 // pred_fallthru
      _
    %p730 = scmp.le.s32.totalorder 2, %s9
    // Predicated region
    $region45: #{patch_embed.1} parent=5 // pred_check
      %p731 = pneg %p730
    $region46: #{patch_embed.1} parent=5 // pred_check_branch
      %733 = sbr.rel (%p731) target = $region48
    $region47: #{patch_embed.1} parent=5 // pred_region
      %s734 = ssub.s32 %s9, 2
      // Predicated region
      $region49: #{patch_embed.1} parent=47 // pred_check
        %p735 = pneg %p125
      $region50: #{patch_embed.1} parent=47 // pred_check_branch
        %737 = sbr.rel (%p735) target = $region52
      $region51: #{patch_embed.1} parent=47 // pred_region
        %s738 = smul.u32 32, %s20
        %p739 = scmp.lt.s32.totalorder %s738, 63
        %s740 = scalar_select %p739, %s738, 63
        %s741 = smul.addr %s740, 8
        %s742 = scalar_lea.vmem %s3, %s741
      $region52: #{patch_embed.1} parent=47 // pred_fallthru
        _
    $region48: #{patch_embed.1} parent=5 // pred_fallthru
      _
  $region6: #{patch_embed.1} parent=0 // loop_footer
    %s13 = sadd.s32 1, %s9
  $region7: #{patch_embed.1} parent=0 // loop_footer_branch
    %8 = sbr.rel target = $region3
  $region8: #{patch_embed.1} parent=0 // loop_exit
    _

</llo_original>
